<compile_context>
chip_gen: v7x
topology: tpu7x:2x2x1
jax: 0.10.0
libtpu: 0.0.40
codegen_flags: <defaults>
</compile_context>

<pallas_src>
import functools

import jax
import jax.numpy as jnp
from jax.experimental import pallas as pl
from jax.experimental.pallas import tpu as pltpu


def _round_up(n: int, m: int) -> int:
    return ((n + m - 1) // m) * m


# ---------------------------------------------------------------------------
# Pallas kernel: one batch tile per grid step.
# ---------------------------------------------------------------------------
def _convo_carpet_kernel(
    x_ref,                       # (tile_B, S, E_pad)        bf16
    wc_ref,                      # (SC, E_pad, K_pad)        bf16
    bc_ref,                      # (1, K_pad)                f32
    w1_ref, b1_ref,              # (K_pad, H1p) bf16, (1, H1p) f32
    w2_ref, b2_ref,              # (H1p, H2p)  bf16, (1, H2p) f32
    w3_ref, b3_ref,              # (H2p, H3p)  bf16, (1, H3p) f32
    w4_ref, b4_ref,              # (H3p, Cp)   bf16, (1, Cp)  f32 (pad = -1e30)
    out_ref,                     # (tile_B, Cp)              f32
    *, sentences_count: int,
):
    Bt, S, Ep = x_ref.shape
    Kp = wc_ref.shape[-1]
    SC = sentences_count
    nw = S - SC + 1              # number of conv windows (>= 1, checked in wrapper)

    # ---- conv (kernel spans the full embedding width) as SC MXU matmuls ----
    # M = Bt*S rows per matmul instead of M = Bt per (window, row) pair.
    xf = x_ref[...].reshape(Bt * S, Ep)
    win = None
    for dh in range(SC):                                     # static, tiny
        y = jnp.dot(xf, wc_ref[dh],
                    preferred_element_type=jnp.float32).reshape(Bt, S, Kp)
        sl = y[:, dh:dh + nw, :]                             # shifted window rows
        win = sl if win is None else win + sl                # (Bt, nw, Kp)

    # Bias + ReLU hoisted out of the window max (max commutes with +const,
    # ReLU is monotone) -> single VPU pass instead of one per window.
    pooled = jnp.max(win, axis=1)                            # (Bt, Kp)
    act = jnp.maximum(pooled + bc_ref[...], 0.0)             # conv+ReLU+maxpool

    def dense(h, w_ref, b_ref):
        return jnp.dot(h.astype(jnp.bfloat16), w_ref[...],
                       preferred_element_type=jnp.float32) + b_ref[...]

    def sigmoid(v):
        # exp + approx reciprocal both run on the EUP slot (no vector divide).
        return pl.reciprocal(1.0 + jnp.exp(-v), approx=True)

    # ---- MLP head (Dropout = identity at inference) ----
    h1 = sigmoid(dense(act, w1_ref, b1_ref))
    h2 = sigmoid(dense(h1, w2_ref, b2_ref))
    h3 = sigmoid(dense(h2, w3_ref, b3_ref))
    logits = dense(h3, w4_ref, b4_ref)        # pad lanes carry -1e30 bias

    # ---- softmax over classes (pad lanes contribute exp(-huge) = 0) ----
    m = jnp.max(logits, axis=-1, keepdims=True)
    e = jnp.exp(logits - m)
    out_ref[...] = e * pl.reciprocal(jnp.sum(e, axis=-1, keepdims=True),
                                     approx=True)


# ---------------------------------------------------------------------------
# Wrapper: padding, batch tiling, BlockSpecs, pallas_call.
# ---------------------------------------------------------------------------
def convo_carpet_deep3_forward(x_nchw, kparams, *, sentences_count: int,
                               num_classes: int):
    """x_nchw: (B, 1, S, E) float32 (PyTorch NCHW). Returns (B, num_classes)."""
    assert x_nchw.shape[1] == 1, "conv expects a single input channel"
    B, _, S, E = x_nchw.shape
    SC = sentences_count
    assert S >= SC, "need S >= sentences_count for at least one conv window"

    Ep = kparams["wc"].shape[1]
    Kp = kparams["wc"].shape[2]
    Cp = kparams["w4"].shape[1]
    H1p, H2p, H3p = (kparams["w1"].shape[1], kparams["w2"].shape[1],
                     kparams["w3"].shape[1])

    x = jnp.squeeze(x_nchw, axis=1).astype(jnp.bfloat16)     # (B, S, E)
    if E < Ep:                                               # lane-pad embedding
        x = jnp.pad(x, ((0, 0), (0, 0), (0, Ep - E)))

    # ---- batch tiling: ~4 MiB bf16 input per tile (safe on v7x's 64 MiB VMEM
    # with double-buffering), multiple of 8 rows for aligned output stores ----
    row_bytes = S * Ep * 2
    tile_B = max(8, min(512, (4 * 1024 * 1024) // max(row_bytes, 1)))
    tile_B = _round_up(min(tile_B, _round_up(B, 8)), 8)
    B_pad = _round_up(B, tile_B)
    if B_pad != B:
        x = jnp.pad(x, ((0, B_pad - B), (0, 0), (0, 0)))
    grid = (B_pad // tile_B,)

    weights = (kparams["wc"], kparams["bc"],
               kparams["w1"], kparams["b1"],
               kparams["w2"], kparams["b2"],
               kparams["w3"], kparams["b3"],
               kparams["w4"], kparams["b4"])

    def _resident(a):
        # Full-array block, constant block index -> stays VMEM-resident.
        nd = a.ndim
        return pl.BlockSpec(a.shape, lambda i, _nd=nd: (0,) * _nd)

    in_specs = [pl.BlockSpec((tile_B, S, Ep), lambda i: (i, 0, 0))]
    in_specs += [_resident(w) for w in weights]
    out_specs = pl.BlockSpec((tile_B, Cp), lambda i: (i, 0))

    # Advisory cost estimate for XLA's scheduler.
    flops = 2 * B_pad * (SC * S * Ep * Kp + Kp * H1p + H1p * H2p
                         + H2p * H3p + H3p * Cp)
    transcendentals = B_pad * (H1p + H2p + H3p + Cp)
    bytes_accessed = (x.size * x.dtype.itemsize
                      + sum(int(w.size) * w.dtype.itemsize for w in weights)
                      + B_pad * Cp * 4)

    kernel = functools.partial(_convo_carpet_kernel, sentences_count=SC)

    out = pl.pallas_call(
        kernel,
        out_shape=jax.ShapeDtypeStruct((B_pad, Cp), jnp.float32),
        grid=grid,
        in_specs=in_specs,
        out_specs=out_specs,
        compiler_params=pltpu.CompilerParams(
            dimension_semantics=("parallel",),    # shards batch over v7x's 2 TCs
            vmem_limit_bytes=32 * 1024 * 1024),
        cost_estimate=pl.CostEstimate(
            flops=int(flops),
            transcendentals=int(transcendentals),
            bytes_accessed=int(bytes_accessed)),
    )(x, *weights)

    return out[:B, :num_classes]


# ---------------------------------------------------------------------------
# Parameter init (raw f32, shapes from ConvoCarpetDeep3.__init__) + padding.
# ---------------------------------------------------------------------------
def init_raw_params(key, *, embedding_size, kernels_count, sentences_count,
                    hidden_layers, number_of_classes):
    ks = jax.random.split(key, 6)

    def lin(k, fan_in, fan_out):
        bound = float(fan_in) ** -0.5
        kw, kb = jax.random.split(k)
        w = jax.random.uniform(kw, (fan_in, fan_out), jnp.float32, -bound, bound)
        b = jax.random.uniform(kb, (1, fan_out), jnp.float32, -bound, bound)
        return w, b

    conv_fan_in = sentences_count * embedding_size
    bound = float(conv_fan_in) ** -0.5
    # stored as (kernel_row, embedding, out_channel) == W[k, 0, dh, e] transposed
    wc = jax.random.uniform(
        ks[0], (sentences_count, embedding_size, kernels_count),
        jnp.float32, -bound, bound)
    bc = jax.random.uniform(ks[1], (1, kernels_count), jnp.float32, -bound, bound)

    w1, b1 = lin(ks[2], kernels_count, hidden_layers[0])
    w2, b2 = lin(ks[3], hidden_layers[0], hidden_layers[1])
    w3, b3 = lin(ks[4], hidden_layers[1], hidden_layers[2])
    w4, b4 = lin(ks[5], hidden_layers[2], number_of_classes)
    return dict(wc=wc, bc=bc, w1=w1, b1=b1, w2=w2, b2=b2, w3=w3, b3=b3,
                w4=w4, b4=b4)


def pad_params_for_kernel(raw):
    """Zero-pad all lane dims to multiples of 128; matmul weights -> bf16,
    biases stay f32.  Final-layer pad lanes get a -1e30 bias so the in-kernel
    softmax puts zero mass there.  Zero pad rows/cols keep the math exact."""
    def pad2(a, rows, cols, fill=0.0):
        out = jnp.full((rows, cols), fill, a.dtype)
        return out.at[:a.shape[0], :a.shape[1]].set(a)

    SC, E, K = raw["wc"].shape
    Ep, Kp = _round_up(E, 128), _round_up(K, 128)
    H1, H2, H3 = raw["w1"].shape[1], raw["w2"].shape[1], raw["w3"].shape[1]
    C = raw["w4"].shape[1]
    H1p, H2p, H3p, Cp = (_round_up(H1, 128), _round_up(H2, 128),
                         _round_up(H3, 128), _round_up(C, 128))

    wc = jnp.zeros((SC, Ep, Kp), jnp.float32).at[:, :E, :K].set(raw["wc"])
    return dict(
        wc=wc.astype(jnp.bfloat16),
        bc=pad2(raw["bc"], 1, Kp),
        w1=pad2(raw["w1"], Kp, H1p).astype(jnp.bfloat16),
        b1=pad2(raw["b1"], 1, H1p),
        w2=pad2(raw["w2"], H1p, H2p).astype(jnp.bfloat16),
        b2=pad2(raw["b2"], 1, H2p),
        w3=pad2(raw["w3"], H2p, H3p).astype(jnp.bfloat16),
        b3=pad2(raw["b3"], 1, H3p),
        w4=pad2(raw["w4"], H3p, Cp).astype(jnp.bfloat16),
        b4=pad2(raw["b4"], 1, Cp, fill=-1e30),
    )


# ---------------------------------------------------------------------------
# Pure-JAX reference (f32, unpadded) for a sanity check.
# ---------------------------------------------------------------------------
def reference_forward(x_nchw, raw, sentences_count):
    x = jnp.squeeze(x_nchw, axis=1)
    B, S, E = x.shape
    nw = S - sentences_count + 1
    wins = []
    for h in range(nw):
        c = raw["bc"]
        for dh in range(sentences_count):
            c = c + x[:, h + dh, :] @ raw["wc"][dh]
        wins.append(jnp.maximum(c, 0.0))
    pooled = jnp.max(jnp.stack(wins, axis=1), axis=1)
    sig = jax.nn.sigmoid
    h1 = sig(pooled @ raw["w1"] + raw["b1"])
    h2 = sig(h1 @ raw["w2"] + raw["b2"])
    h3 = sig(h2 @ raw["w3"] + raw["b3"])
    logits = h3 @ raw["w4"] + raw["b4"]
    return jax.nn.softmax(logits, axis=1)


if __name__ == "__main__":
    # Small shapes consistent with the module's forward:
    B = 2                    # batch
    S = 8                    # sentences (conv H)
    E = 32                   # embedding_size (conv W, fully spanned by kernel)
    K = 64                   # kernels_count
    SC = 2                   # sentences_count (conv kernel height)
    HIDDEN = [10, 10, 10]
    NUM_CLASSES = 4

    key = jax.random.PRNGKey(0)
    k_x, k_p = jax.random.split(key)

    raw = init_raw_params(
        k_p, embedding_size=E, kernels_count=K, sentences_count=SC,
        hidden_layers=HIDDEN, number_of_classes=NUM_CLASSES)
    kparams = pad_params_for_kernel(raw)

    # convert_input: (B, S, E) -> unsqueeze(1) -> (B, 1, S, E)  (NCHW)
    x = jax.random.normal(k_x, (B, 1, S, E), jnp.float32)

    out = convo_carpet_deep3_forward(x, kparams, sentences_count=SC,
                                     num_classes=NUM_CLASSES)
    out = jax.block_until_ready(out)

    assert out.shape == (B, NUM_CLASSES)
    assert bool(jnp.all(jnp.isfinite(out)))
    # softmax rows sum to ~1 (approx reciprocal -> loose tolerance)
    assert bool(jnp.all(jnp.abs(jnp.sum(out, axis=1) - 1.0) < 1e-2))
    # matches the pure-JAX f32 reference within bf16 / approx-reciprocal error
    ref = reference_forward(x, raw, SC)
    assert bool(jnp.all(jnp.abs(out - ref) < 5e-2))

    print("KERNEL_OK")
</pallas_src>

<mosaic_0001>
module attributes {stable_mosaic.version = 11 : i64} {
  func.func @_convo_carpet_kernel(%arg0: i32, %arg1: memref<8x8x128xbf16, #tpu.memory_space<vmem>>, %arg2: memref<2x128x128xbf16, #tpu.memory_space<vmem>>, %arg3: memref<1x128xf32, #tpu.memory_space<vmem>>, %arg4: memref<128x128xbf16, #tpu.memory_space<vmem>>, %arg5: memref<1x128xf32, #tpu.memory_space<vmem>>, %arg6: memref<128x128xbf16, #tpu.memory_space<vmem>>, %arg7: memref<1x128xf32, #tpu.memory_space<vmem>>, %arg8: memref<128x128xbf16, #tpu.memory_space<vmem>>, %arg9: memref<1x128xf32, #tpu.memory_space<vmem>>, %arg10: memref<128x128xbf16, #tpu.memory_space<vmem>>, %arg11: memref<1x128xf32, #tpu.memory_space<vmem>>, %arg12: memref<8x128xf32, #tpu.memory_space<vmem>>) attributes {dimension_semantics = [#tpu.dimension_semantics<parallel>], iteration_bounds = array<i64: 1>, scalar_prefetch = 0 : i64, scratch_operands = 0 : i64, tpu.core_type = #tpu.core_type<tc>, window_params = [{transform_indices = @transform_0, window_bounds = array<i64: 8, 8, 128>}, {pipeline_mode = #tpu.pipeline_mode<synchronous>, transform_indices = @transform_1, window_bounds = array<i64: 2, 128, 128>}, {pipeline_mode = #tpu.pipeline_mode<synchronous>, transform_indices = @transform_2, window_bounds = array<i64: 1, 128>}, {pipeline_mode = #tpu.pipeline_mode<synchronous>, transform_indices = @transform_3, window_bounds = array<i64: 128, 128>}, {pipeline_mode = #tpu.pipeline_mode<synchronous>, transform_indices = @transform_4, window_bounds = array<i64: 1, 128>}, {pipeline_mode = #tpu.pipeline_mode<synchronous>, transform_indices = @transform_5, window_bounds = array<i64: 128, 128>}, {pipeline_mode = #tpu.pipeline_mode<synchronous>, transform_indices = @transform_6, window_bounds = array<i64: 1, 128>}, {pipeline_mode = #tpu.pipeline_mode<synchronous>, transform_indices = @transform_7, window_bounds = array<i64: 128, 128>}, {pipeline_mode = #tpu.pipeline_mode<synchronous>, transform_indices = @transform_8, window_bounds = array<i64: 1, 128>}, {pipeline_mode = #tpu.pipeline_mode<synchronous>, transform_indices = @transform_9, window_bounds = array<i64: 128, 128>}, {pipeline_mode = #tpu.pipeline_mode<synchronous>, transform_indices = @transform_10, window_bounds = array<i64: 1, 128>}, {transform_indices = @transform_11, window_bounds = array<i64: 8, 128>}]} {
    %c0 = arith.constant 0 : index
    %c0_0 = arith.constant 0 : index
    %c0_1 = arith.constant 0 : index
    %0 = vector.load %arg1[%c0, %c0_0, %c0_1] : memref<8x8x128xbf16, #tpu.memory_space<vmem>>, vector<8x8x128xbf16>
    %1 = vector.shape_cast %0 : vector<8x8x128xbf16> to vector<64x128xbf16>
    %c0_2 = arith.constant 0 : index
    %c0_3 = arith.constant 0 : index
    %c0_4 = arith.constant 0 : index
    %2 = vector.load %arg2[%c0_2, %c0_3, %c0_4] : memref<2x128x128xbf16, #tpu.memory_space<vmem>>, vector<1x128x128xbf16>
    %3 = vector.shape_cast %2 : vector<1x128x128xbf16> to vector<128x128xbf16>
    %cst = arith.constant dense<0.000000e+00> : vector<64x128xf32>
    %4 = tpu.matmul %1, %3, %cst {dimension_numbers = #tpu.dot_dimension_numbers<[1], [0], [0], [1], [0, 0, 1, 1], [], []>} : vector<64x128xbf16>, vector<128x128xbf16>, vector<64x128xf32> -> vector<64x128xf32>
    %5 = vector.shape_cast %4 : vector<64x128xf32> to vector<8x8x128xf32>
    %6 = vector.extract_strided_slice %5 {offsets = [0, 0, 0], sizes = [8, 7, 128], strides = [1, 1, 1]} : vector<8x8x128xf32> to vector<8x7x128xf32>
    %c1 = arith.constant 1 : index
    %c0_5 = arith.constant 0 : index
    %c0_6 = arith.constant 0 : index
    %7 = vector.load %arg2[%c1, %c0_5, %c0_6] : memref<2x128x128xbf16, #tpu.memory_space<vmem>>, vector<1x128x128xbf16>
    %8 = vector.shape_cast %7 : vector<1x128x128xbf16> to vector<128x128xbf16>
    %cst_7 = arith.constant dense<0.000000e+00> : vector<64x128xf32>
    %9 = tpu.matmul %1, %8, %cst_7 {dimension_numbers = #tpu.dot_dimension_numbers<[1], [0], [0], [1], [0, 0, 1, 1], [], []>} : vector<64x128xbf16>, vector<128x128xbf16>, vector<64x128xf32> -> vector<64x128xf32>
    %10 = vector.shape_cast %9 : vector<64x128xf32> to vector<8x8x128xf32>
    %11 = vector.extract_strided_slice %10 {offsets = [0, 1, 0], sizes = [8, 7, 128], strides = [1, 1, 1]} : vector<8x8x128xf32> to vector<8x7x128xf32>
    %12 = arith.addf %6, %11 : vector<8x7x128xf32>
    %cst_8 = arith.constant dense<0xFF800000> : vector<8x128xf32>
    %13 = vector.multi_reduction <maximumf>, %12, %cst_8 [1] : vector<8x7x128xf32> to vector<8x128xf32>
    %c0_9 = arith.constant 0 : index
    %c0_10 = arith.constant 0 : index
    %14 = vector.load %arg3[%c0_9, %c0_10] : memref<1x128xf32, #tpu.memory_space<vmem>>, vector<1x128xf32>
    %15 = vector.broadcast %14 : vector<1x128xf32> to vector<8x128xf32>
    %16 = arith.addf %13, %15 : vector<8x128xf32>
    %cst_11 = arith.constant 0.000000e+00 : f32
    %17 = vector.broadcast %cst_11 : f32 to vector<8x128xf32>
    %18 = arith.maximumf %16, %17 : vector<8x128xf32>
    %19 = arith.truncf %18 : vector<8x128xf32> to vector<8x128xbf16>
    %c0_12 = arith.constant 0 : index
    %c0_13 = arith.constant 0 : index
    %20 = vector.load %arg4[%c0_12, %c0_13] : memref<128x128xbf16, #tpu.memory_space<vmem>>, vector<128x128xbf16>
    %cst_14 = arith.constant dense<0.000000e+00> : vector<8x128xf32>
    %21 = tpu.matmul %19, %20, %cst_14 {dimension_numbers = #tpu.dot_dimension_numbers<[1], [0], [0], [1], [0, 0, 1, 1], [], []>} : vector<8x128xbf16>, vector<128x128xbf16>, vector<8x128xf32> -> vector<8x128xf32>
    %c0_15 = arith.constant 0 : index
    %c0_16 = arith.constant 0 : index
    %22 = vector.load %arg5[%c0_15, %c0_16] : memref<1x128xf32, #tpu.memory_space<vmem>>, vector<1x128xf32>
    %23 = vector.broadcast %22 : vector<1x128xf32> to vector<8x128xf32>
    %24 = arith.addf %21, %23 : vector<8x128xf32>
    %cst_17 = arith.constant 0.000000e+00 : f32
    %25 = vector.broadcast %cst_17 : f32 to vector<8x128xf32>
    %26 = arith.subf %25, %24 : vector<8x128xf32>
    %27 = math.exp %26 : vector<8x128xf32>
    %cst_18 = arith.constant 1.000000e+00 : f32
    %28 = vector.broadcast %cst_18 : f32 to vector<8x128xf32>
    %29 = arith.addf %28, %27 : vector<8x128xf32>
    %30 = tpu.reciprocal %29 {approx = true} : vector<8x128xf32> -> vector<8x128xf32>
    %31 = arith.truncf %30 : vector<8x128xf32> to vector<8x128xbf16>
    %c0_19 = arith.constant 0 : index
    %c0_20 = arith.constant 0 : index
    %32 = vector.load %arg6[%c0_19, %c0_20] : memref<128x128xbf16, #tpu.memory_space<vmem>>, vector<128x128xbf16>
    %cst_21 = arith.constant dense<0.000000e+00> : vector<8x128xf32>
    %33 = tpu.matmul %31, %32, %cst_21 {dimension_numbers = #tpu.dot_dimension_numbers<[1], [0], [0], [1], [0, 0, 1, 1], [], []>} : vector<8x128xbf16>, vector<128x128xbf16>, vector<8x128xf32> -> vector<8x128xf32>
    %c0_22 = arith.constant 0 : index
    %c0_23 = arith.constant 0 : index
    %34 = vector.load %arg7[%c0_22, %c0_23] : memref<1x128xf32, #tpu.memory_space<vmem>>, vector<1x128xf32>
    %35 = vector.broadcast %34 : vector<1x128xf32> to vector<8x128xf32>
    %36 = arith.addf %33, %35 : vector<8x128xf32>
    %cst_24 = arith.constant 0.000000e+00 : f32
    %37 = vector.broadcast %cst_24 : f32 to vector<8x128xf32>
    %38 = arith.subf %37, %36 : vector<8x128xf32>
    %39 = math.exp %38 : vector<8x128xf32>
    %cst_25 = arith.constant 1.000000e+00 : f32
    %40 = vector.broadcast %cst_25 : f32 to vector<8x128xf32>
    %41 = arith.addf %40, %39 : vector<8x128xf32>
    %42 = tpu.reciprocal %41 {approx = true} : vector<8x128xf32> -> vector<8x128xf32>
    %43 = arith.truncf %42 : vector<8x128xf32> to vector<8x128xbf16>
    %c0_26 = arith.constant 0 : index
    %c0_27 = arith.constant 0 : index
    %44 = vector.load %arg8[%c0_26, %c0_27] : memref<128x128xbf16, #tpu.memory_space<vmem>>, vector<128x128xbf16>
    %cst_28 = arith.constant dense<0.000000e+00> : vector<8x128xf32>
    %45 = tpu.matmul %43, %44, %cst_28 {dimension_numbers = #tpu.dot_dimension_numbers<[1], [0], [0], [1], [0, 0, 1, 1], [], []>} : vector<8x128xbf16>, vector<128x128xbf16>, vector<8x128xf32> -> vector<8x128xf32>
    %c0_29 = arith.constant 0 : index
    %c0_30 = arith.constant 0 : index
    %46 = vector.load %arg9[%c0_29, %c0_30] : memref<1x128xf32, #tpu.memory_space<vmem>>, vector<1x128xf32>
    %47 = vector.broadcast %46 : vector<1x128xf32> to vector<8x128xf32>
    %48 = arith.addf %45, %47 : vector<8x128xf32>
    %cst_31 = arith.constant 0.000000e+00 : f32
    %49 = vector.broadcast %cst_31 : f32 to vector<8x128xf32>
    %50 = arith.subf %49, %48 : vector<8x128xf32>
    %51 = math.exp %50 : vector<8x128xf32>
    %cst_32 = arith.constant 1.000000e+00 : f32
    %52 = vector.broadcast %cst_32 : f32 to vector<8x128xf32>
    %53 = arith.addf %52, %51 : vector<8x128xf32>
    %54 = tpu.reciprocal %53 {approx = true} : vector<8x128xf32> -> vector<8x128xf32>
    %55 = arith.truncf %54 : vector<8x128xf32> to vector<8x128xbf16>
    %c0_33 = arith.constant 0 : index
    %c0_34 = arith.constant 0 : index
    %56 = vector.load %arg10[%c0_33, %c0_34] : memref<128x128xbf16, #tpu.memory_space<vmem>>, vector<128x128xbf16>
    %cst_35 = arith.constant dense<0.000000e+00> : vector<8x128xf32>
    %57 = tpu.matmul %55, %56, %cst_35 {dimension_numbers = #tpu.dot_dimension_numbers<[1], [0], [0], [1], [0, 0, 1, 1], [], []>} : vector<8x128xbf16>, vector<128x128xbf16>, vector<8x128xf32> -> vector<8x128xf32>
    %c0_36 = arith.constant 0 : index
    %c0_37 = arith.constant 0 : index
    %58 = vector.load %arg11[%c0_36, %c0_37] : memref<1x128xf32, #tpu.memory_space<vmem>>, vector<1x128xf32>
    %59 = vector.broadcast %58 : vector<1x128xf32> to vector<8x128xf32>
    %60 = arith.addf %57, %59 : vector<8x128xf32>
    %cst_38 = arith.constant dense<0xFF800000> : vector<8xf32>
    %61 = vector.multi_reduction <maximumf>, %60, %cst_38 [1] : vector<8x128xf32> to vector<8xf32>
    %62 = vector.shape_cast %61 : vector<8xf32> to vector<8x1xf32>
    %63 = vector.broadcast %62 : vector<8x1xf32> to vector<8x128xf32>
    %64 = arith.subf %60, %63 : vector<8x128xf32>
    %65 = math.exp %64 : vector<8x128xf32>
    %cst_39 = arith.constant dense<0.000000e+00> : vector<8xf32>
    %66 = vector.multi_reduction <add>, %65, %cst_39 [1] : vector<8x128xf32> to vector<8xf32>
    %67 = vector.shape_cast %66 : vector<8xf32> to vector<8x1xf32>
    %68 = tpu.reciprocal %67 {approx = true} : vector<8x1xf32> -> vector<8x1xf32>
    %69 = vector.broadcast %68 : vector<8x1xf32> to vector<8x128xf32>
    %70 = arith.mulf %65, %69 : vector<8x128xf32>
    %c0_40 = arith.constant 0 : index
    %c0_41 = arith.constant 0 : index
    %71 = vector.load %arg12[%c0_40, %c0_41] : memref<8x128xf32, #tpu.memory_space<vmem>>, vector<8x128xf32>
    tpu.vector_store %arg12[%c0_40, %c0_41], %70 {strides = array<i32>} : memref<8x128xf32, #tpu.memory_space<vmem>>, vector<8x128xf32>,
    return
  }
  func.func @transform_0(%arg0: i32) -> (i32, i32, i32) {
    %c0_i32 = arith.constant 0 : i32
    %c0_i32_0 = arith.constant 0 : i32
    %c0_i32_1 = arith.constant 0 : i32
    return %arg0, %c0_i32, %c0_i32_0 : i32, i32, i32
  }
  func.func @transform_1(%arg0: i32) -> (i32, i32, i32) {
    %c0_i32 = arith.constant 0 : i32
    %c0_i32_0 = arith.constant 0 : i32
    %c0_i32_1 = arith.constant 0 : i32
    %c0_i32_2 = arith.constant 0 : i32
    return %c0_i32, %c0_i32_0, %c0_i32_1 : i32, i32, i32
  }
  func.func @transform_2(%arg0: i32) -> (i32, i32) {
    %c0_i32 = arith.constant 0 : i32
    %c0_i32_0 = arith.constant 0 : i32
    %c0_i32_1 = arith.constant 0 : i32
    return %c0_i32, %c0_i32_0 : i32, i32
  }
  func.func @transform_3(%arg0: i32) -> (i32, i32) {
    %c0_i32 = arith.constant 0 : i32
    %c0_i32_0 = arith.constant 0 : i32
    %c0_i32_1 = arith.constant 0 : i32
    return %c0_i32, %c0_i32_0 : i32, i32
  }
  func.func @transform_4(%arg0: i32) -> (i32, i32) {
    %c0_i32 = arith.constant 0 : i32
    %c0_i32_0 = arith.constant 0 : i32
    %c0_i32_1 = arith.constant 0 : i32
    return %c0_i32, %c0_i32_0 : i32, i32
  }
  func.func @transform_5(%arg0: i32) -> (i32, i32) {
    %c0_i32 = arith.constant 0 : i32
    %c0_i32_0 = arith.constant 0 : i32
    %c0_i32_1 = arith.constant 0 : i32
    return %c0_i32, %c0_i32_0 : i32, i32
  }
  func.func @transform_6(%arg0: i32) -> (i32, i32) {
    %c0_i32 = arith.constant 0 : i32
    %c0_i32_0 = arith.constant 0 : i32
    %c0_i32_1 = arith.constant 0 : i32
    return %c0_i32, %c0_i32_0 : i32, i32
  }
  func.func @transform_7(%arg0: i32) -> (i32, i32) {
    %c0_i32 = arith.constant 0 : i32
    %c0_i32_0 = arith.constant 0 : i32
    %c0_i32_1 = arith.constant 0 : i32
    return %c0_i32, %c0_i32_0 : i32, i32
  }
  func.func @transform_8(%arg0: i32) -> (i32, i32) {
    %c0_i32 = arith.constant 0 : i32
    %c0_i32_0 = arith.constant 0 : i32
    %c0_i32_1 = arith.constant 0 : i32
    return %c0_i32, %c0_i32_0 : i32, i32
  }
  func.func @transform_9(%arg0: i32) -> (i32, i32) {
    %c0_i32 = arith.constant 0 : i32
    %c0_i32_0 = arith.constant 0 : i32
    %c0_i32_1 = arith.constant 0 : i32
    return %c0_i32, %c0_i32_0 : i32, i32
  }
  func.func @transform_10(%arg0: i32) -> (i32, i32) {
    %c0_i32 = arith.constant 0 : i32
    %c0_i32_0 = arith.constant 0 : i32
    %c0_i32_1 = arith.constant 0 : i32
    return %c0_i32, %c0_i32_0 : i32, i32
  }
  func.func @transform_11(%arg0: i32) -> (i32, i32) {
    %c0_i32 = arith.constant 0 : i32
    %c0_i32_0 = arith.constant 0 : i32
    return %arg0, %c0_i32 : i32, i32
  }
}

</mosaic_0001>

<llo_original>
// kernel: tpu_custom_call.1
$region0: #{tpu_custom_call.1}
  #allocation0 [shape = 'u32[]', space=smem, size = 0x4, offset = 0x4, fixed_abs, tag = 'smem constant byte address 0x4 - core index']
  #allocation1 [shape = 'u32[144,128]{1,0:T(1,128)}', space=vmem, size = 0x12000, scoped, tag = 'internal scratch']
  %s0 = inlined_call_operand.hbm [shape: bf16[8,8,128], index: 0, kind: input, shape index: {}]
  %s1 = inlined_call_operand.hbm [shape: bf16[2,128,128], index: 1, kind: input, shape index: {}]
  %s2 = inlined_call_operand.vmem [shape: f32[1,128], index: 2, kind: input, shape index: {}]
  %s3 = inlined_call_operand.hbm [shape: bf16[128,128], index: 3, kind: input, shape index: {}]
  %s4 = inlined_call_operand.vmem [shape: f32[1,128], index: 4, kind: input, shape index: {}]
  %s5 = inlined_call_operand.hbm [shape: bf16[128,128], index: 5, kind: input, shape index: {}]
  %s6 = inlined_call_operand.vmem [shape: f32[1,128], index: 6, kind: input, shape index: {}]
  %s7 = inlined_call_operand.hbm [shape: bf16[128,128], index: 7, kind: input, shape index: {}]
  %s8 = inlined_call_operand.vmem [shape: f32[1,128], index: 8, kind: input, shape index: {}]
  %s9 = inlined_call_operand.hbm [shape: bf16[128,128], index: 9, kind: input, shape index: {}]
  %s10 = inlined_call_operand.vmem [shape: f32[1,128], index: 10, kind: input, shape index: {}]
  %s11 = inlined_call_operand.hbm [shape: f32[8,128], index: 11, kind: output, shape index: {}]
  %s12 = sld [smem:[#allocation0]]
  $region78: #{tpu_custom_call.1} parent=0
    _
  %s14 = ssub.s32 1, %s12
  %s15 = scalar_select 0, %s14, %s12
  $region1: #{tpu_custom_call.1} parent=0
    #allocation2 [shape = 'u8[16384]{0}', space=vmem, size = 0x4000, scoped, tag = 'input window, operand 0, single buffered']
    #allocation3 [shape = 's32[1]{0}', space=sflag, size = 0x4, scoped, tag = 'scoped memory for tpu_custom_call.1']
    #allocation4 [shape = 's32[1]{0}', space=sflag, size = 0x4, scoped, tag = 'scoped memory for tpu_custom_call.1']
    #allocation5 [shape = 'u8[65536]{0}', space=vmem, size = 0x10000, scoped, tag = 'input window, operand 1, single buffered']
    #allocation6 [shape = 's32[1]{0}', space=sflag, size = 0x4, scoped, tag = 'scoped memory for tpu_custom_call.1']
    #allocation7 [shape = 'u8[32768]{0}', space=vmem, size = 0x8000, scoped, tag = 'input window, operand 3, single buffered']
    #allocation8 [shape = 'u8[32768]{0}', space=vmem, size = 0x8000, scoped, tag = 'input window, operand 5, single buffered']
    #allocation9 [shape = 's32[1]{0}', space=sflag, size = 0x4, scoped, tag = 'scoped memory for tpu_custom_call.1']
    #allocation10 [shape = 'u8[32768]{0}', space=vmem, size = 0x8000, scoped, tag = 'input window, operand 7, single buffered']
    #allocation11 [shape = 'u8[32768]{0}', space=vmem, size = 0x8000, scoped, tag = 'input window, operand 9, single buffered']
    #allocation12 [shape = 's32[1]{0}', space=sflag, size = 0x4, scoped, tag = 'scoped memory for tpu_custom_call.1']
    #allocation13 [shape = 'u8[4096]{0}', space=vmem, size = 0x1000, scoped, tag = 'output window, operand 0, single buffered']
    %16 = vsyncpa [#allocation3], 0
    %17 = vsyncpa [#allocation6], 0
    %18 = vsyncpa [#allocation9], 0
    %19 = vsyncpa [#allocation12], 0
    %20 = vsyncpa [#allocation4], 0
    // Predicated region
    $region2: #{tpu_custom_call.1} parent=1 // pred_check
      _
    $region3: #{tpu_custom_call.1} parent=1 // pred_check_branch
      %22 = sbr.rel (0) target = $region5
    $region4: #{tpu_custom_call.1} parent=1 // pred_region
      %s24 = ssub.s32 512, 512
      %25 = vsyncadd [#allocation3], %s24
      %s26 = sshll.u32 [#allocation2], 4
      %s27 = int_to_ptr.vmem [resolvable:$true] %s26
      %32 = dma.hbm_to_vmem [thread:$0]  %s0, 512, %s27, [#allocation3], 64, 64, 4
    $region5: #{tpu_custom_call.1} parent=1 // pred_fallthru
      _
    // Predicated region
    $region6: #{tpu_custom_call.1} parent=1 // pred_check
      _
    $region7: #{tpu_custom_call.1} parent=1 // pred_check_branch
      %34 = sbr.rel (0) target = $region9
    $region8: #{tpu_custom_call.1} parent=1 // pred_region
      %s36 = ssub.s32 2048, 2048
      %37 = vsyncadd [#allocation6], %s36
      %s38 = sshll.u32 [#allocation5], 4
      %s39 = int_to_ptr.vmem [resolvable:$true] %s38
      %44 = dma.hbm_to_vmem [thread:$0]  %s1, 2048, %s39, [#allocation6], 64, 64, 4
    $region9: #{tpu_custom_call.1} parent=1 // pred_fallthru
      _
    // Predicated region
    $region10: #{tpu_custom_call.1} parent=1 // pred_check
      _
    $region11: #{tpu_custom_call.1} parent=1 // pred_check_branch
      %46 = sbr.rel (0) target = $region13
    $region12: #{tpu_custom_call.1} parent=1 // pred_region
      _
    $region13: #{tpu_custom_call.1} parent=1 // pred_fallthru
      _
    // Predicated region
    $region14: #{tpu_custom_call.1} parent=1 // pred_check
      _
    $region15: #{tpu_custom_call.1} parent=1 // pred_check_branch
      %48 = sbr.rel (0) target = $region17
    $region16: #{tpu_custom_call.1} parent=1 // pred_region
      %s50 = ssub.s32 1024, 1024
      %51 = vsyncadd [#allocation6], %s50
      %s52 = sshll.u32 [#allocation7], 4
      %s53 = int_to_ptr.vmem [resolvable:$true] %s52
      %58 = dma.hbm_to_vmem [thread:$0]  %s3, 1024, %s53, [#allocation6], 64, 64, 4
    $region17: #{tpu_custom_call.1} parent=1 // pred_fallthru
      _
    // Predicated region
    $region18: #{tpu_custom_call.1} parent=1 // pred_check
      _
    $region19: #{tpu_custom_call.1} parent=1 // pred_check_branch
      %60 = sbr.rel (0) target = $region21
    $region20: #{tpu_custom_call.1} parent=1 // pred_region
      _
    $region21: #{tpu_custom_call.1} parent=1 // pred_fallthru
      _
    // Predicated region
    $region22: #{tpu_custom_call.1} parent=1 // pred_check
      _
    $region23: #{tpu_custom_call.1} parent=1 // pred_check_branch
      %62 = sbr.rel (0) target = $region25
    $region24: #{tpu_custom_call.1} parent=1 // pred_region
      %s64 = ssub.s32 1024, 1024
      %65 = vsyncadd [#allocation9], %s64
      %s66 = sshll.u32 [#allocation8], 4
      %s67 = int_to_ptr.vmem [resolvable:$true] %s66
      %72 = dma.hbm_to_vmem [thread:$0]  %s5, 1024, %s67, [#allocation9], 64, 64, 4
    $region25: #{tpu_custom_call.1} parent=1 // pred_fallthru
      _
    // Predicated region
    $region26: #{tpu_custom_call.1} parent=1 // pred_check
      _
    $region27: #{tpu_custom_call.1} parent=1 // pred_check_branch
      %74 = sbr.rel (0) target = $region29
    $region28: #{tpu_custom_call.1} parent=1 // pred_region
      _
    $region29: #{tpu_custom_call.1} parent=1 // pred_fallthru
      _
    // Predicated region
    $region30: #{tpu_custom_call.1} parent=1 // pred_check
      _
    $region31: #{tpu_custom_call.1} parent=1 // pred_check_branch
      %76 = sbr.rel (0) target = $region33
    $region32: #{tpu_custom_call.1} parent=1 // pred_region
      %s78 = ssub.s32 1024, 1024
      %79 = vsyncadd [#allocation9], %s78
      %s80 = sshll.u32 [#allocation10], 4
      %s81 = int_to_ptr.vmem [resolvable:$true] %s80
      %86 = dma.hbm_to_vmem [thread:$0]  %s7, 1024, %s81, [#allocation9], 64, 64, 4
    $region33: #{tpu_custom_call.1} parent=1 // pred_fallthru
      _
    // Predicated region
    $region34: #{tpu_custom_call.1} parent=1 // pred_check
      _
    $region35: #{tpu_custom_call.1} parent=1 // pred_check_branch
      %88 = sbr.rel (0) target = $region37
    $region36: #{tpu_custom_call.1} parent=1 // pred_region
      _
    $region37: #{tpu_custom_call.1} parent=1 // pred_fallthru
      _
    // Predicated region
    $region38: #{tpu_custom_call.1} parent=1 // pred_check
      _
    $region39: #{tpu_custom_call.1} parent=1 // pred_check_branch
      %90 = sbr.rel (0) target = $region41
    $region40: #{tpu_custom_call.1} parent=1 // pred_region
      %s92 = ssub.s32 1024, 1024
      %93 = vsyncadd [#allocation12], %s92
      %s94 = sshll.u32 [#allocation11], 4
      %s95 = int_to_ptr.vmem [resolvable:$true] %s94
      %100 = dma.hbm_to_vmem [thread:$0]  %s9, 1024, %s95, [#allocation12], 64, 64, 4
    $region41: #{tpu_custom_call.1} parent=1 // pred_fallthru
      _
    // Predicated region
    $region42: #{tpu_custom_call.1} parent=1 // pred_check
      _
    $region43: #{tpu_custom_call.1} parent=1 // pred_check_branch
      %102 = sbr.rel (0) target = $region45
    $region44: #{tpu_custom_call.1} parent=1 // pred_region
      _
    $region45: #{tpu_custom_call.1} parent=1 // pred_fallthru
      _
    // Predicated region
    $region46: #{tpu_custom_call.1} parent=1 // pred_check
      _
    $region47: #{tpu_custom_call.1} parent=1 // pred_check_branch
      %104 = sbr.rel (0) target = $region49
    $region48: #{tpu_custom_call.1} parent=1 // pred_region
      %105 = dma.done [#allocation3], 512
    $region49: #{tpu_custom_call.1} parent=1 // pred_fallthru
      _
    // Predicated region
    $region50: #{tpu_custom_call.1} parent=1 // pred_check
      _
    $region51: #{tpu_custom_call.1} parent=1 // pred_check_branch
      %107 = sbr.rel (0) target = $region53
    $region52: #{tpu_custom_call.1} parent=1 // pred_region
      %108 = dma.done [#allocation6], 2048
    $region53: #{tpu_custom_call.1} parent=1 // pred_fallthru
      _
    // Predicated region
    $region54: #{tpu_custom_call.1} parent=1 // pred_check
      _
    $region55: #{tpu_custom_call.1} parent=1 // pred_check_branch
      %110 = sbr.rel (0) target = $region57
    $region56: #{tpu_custom_call.1} parent=1 // pred_region
      %111 = dma.done [#allocation6], 1024
    $region57: #{tpu_custom_call.1} parent=1 // pred_fallthru
      _
    // Predicated region
    $region58: #{tpu_custom_call.1} parent=1 // pred_check
      _
    $region59: #{tpu_custom_call.1} parent=1 // pred_check_branch
      %113 = sbr.rel (0) target = $region61
    $region60: #{tpu_custom_call.1} parent=1 // pred_region
      %114 = dma.done [#allocation9], 1024
    $region61: #{tpu_custom_call.1} parent=1 // pred_fallthru
      _
    // Predicated region
    $region62: #{tpu_custom_call.1} parent=1 // pred_check
      _
    $region63: #{tpu_custom_call.1} parent=1 // pred_check_branch
      %116 = sbr.rel (0) target = $region65
    $region64: #{tpu_custom_call.1} parent=1 // pred_region
      %117 = dma.done [#allocation9], 1024
    $region65: #{tpu_custom_call.1} parent=1 // pred_fallthru
      _
    // Predicated region
    $region66: #{tpu_custom_call.1} parent=1 // pred_check
      _
    $region67: #{tpu_custom_call.1} parent=1 // pred_check_branch
      %119 = sbr.rel (0) target = $region69
    $region68: #{tpu_custom_call.1} parent=1 // pred_region
      %120 = dma.done [#allocation12], 1024
    $region69: #{tpu_custom_call.1} parent=1 // pred_fallthru
      _
    %v122 = vld [vmem:[#allocation2] sm:$0xf]
    %v123 = vld [vmem:[#allocation2 + $0x4] sm:$0xf]
    %v124 = vld [vmem:[#allocation2 + $0x8] sm:$0xf]
    %v125 = vld [vmem:[#allocation2 + $0xc] sm:$0xf]
    %v126 = vld [vmem:[#allocation2 + $0x10] sm:$0xf]
    %v127 = vld [vmem:[#allocation2 + $0x14] sm:$0xf]
    %v128 = vld [vmem:[#allocation2 + $0x18] sm:$0xf]
    %v129 = vld [vmem:[#allocation2 + $0x1c] sm:$0xf]
    %v130 = vld [vmem:[#allocation5] sm:$0xf]
    %v131 = vld [vmem:[#allocation5 + $0x4] sm:$0xf]
    %v132 = vld [vmem:[#allocation5 + $0x8] sm:$0xf]
    %v133 = vld [vmem:[#allocation5 + $0xc] sm:$0xf]
    %v134 = vld [vmem:[#allocation5 + $0x10] sm:$0xf]
    %v135 = vld [vmem:[#allocation5 + $0x14] sm:$0xf]
    %v136 = vld [vmem:[#allocation5 + $0x18] sm:$0xf]
    %v137 = vld [vmem:[#allocation5 + $0x1c] sm:$0xf]
    %v138 = vld [vmem:[#allocation5 + $0x20] sm:$0xf]
    %v139 = vld [vmem:[#allocation5 + $0x24] sm:$0xf]
    %v140 = vld [vmem:[#allocation5 + $0x28] sm:$0xf]
    %v141 = vld [vmem:[#allocation5 + $0x2c] sm:$0xf]
    %v142 = vld [vmem:[#allocation5 + $0x30] sm:$0xf]
    %v143 = vld [vmem:[#allocation5 + $0x34] sm:$0xf]
    %v144 = vld [vmem:[#allocation5 + $0x38] sm:$0xf]
    %v145 = vld [vmem:[#allocation5 + $0x3c] sm:$0xf]
    %v154 = vunpack.c.l.b16 %v122
    %v155 = vunpack.c.l.b16 %v123
    %v156 = vunpack.c.l.b16 %v124
    %v157 = vunpack.c.l.b16 %v125
    %v158 = vunpack.c.l.b16 %v126
    %v159 = vunpack.c.l.b16 %v127
    %v160 = vunpack.c.l.b16 %v128
    %v161 = vunpack.c.l.b16 %v129
    %v162 = vpack.c.b16 %v155, %v154
    %v163 = vpack.c.b16 %v157, %v156
    %v164 = vpack.c.b16 %v159, %v158
    %v165 = vpack.c.b16 %v161, %v160
    %v186 = vunpack.c.l.b16 %v130
    %v187 = vunpack.c.l.b16 %v131
    %v188 = vunpack.c.l.b16 %v132
    %v189 = vunpack.c.l.b16 %v133
    %v190 = vunpack.c.l.b16 %v134
    %v191 = vunpack.c.l.b16 %v135
    %v192 = vunpack.c.l.b16 %v136
    %v193 = vunpack.c.l.b16 %v137
    %v194 = vunpack.c.l.b16 %v138
    %v195 = vunpack.c.l.b16 %v139
    %v196 = vunpack.c.l.b16 %v140
    %v197 = vunpack.c.l.b16 %v141
    %v198 = vunpack.c.l.b16 %v142
    %v199 = vunpack.c.l.b16 %v143
    %v200 = vunpack.c.l.b16 %v144
    %v201 = vunpack.c.l.b16 %v145
    %v202 = vpack.c.b16 %v187, %v186
    %v203 = vpack.c.b16 %v189, %v188
    %v204 = vpack.c.b16 %v191, %v190
    %v205 = vpack.c.b16 %v193, %v192
    %v206 = vpack.c.b16 %v195, %v194
    %v207 = vpack.c.b16 %v197, %v196
    %v208 = vpack.c.b16 %v199, %v198
    %v209 = vpack.c.b16 %v201, %v200
    %218 = vmatprep.subr.bf16.mxu0 0
    %219 = vmatpush1.bf16.msra.mxu0 %v202
    %220 = vmatprep.subr.bf16.mxu0 0
    %221 = vmatpush1.bf16.msra.mxu0 %v203
    %222 = vmatprep.subr.bf16.mxu0 0
    %223 = vmatpush1.bf16.msra.mxu0 %v204
    %224 = vmatprep.subr.bf16.mxu0 0
    %225 = vmatpush1.bf16.msra.mxu0 %v205
    %226 = vmatprep.subr.bf16.mxu0 0
    %227 = vmatpush1.bf16.msra.mxu0 %v206
    %228 = vmatprep.subr.bf16.mxu0 0
    %229 = vmatpush1.bf16.msra.mxu0 %v207
    %230 = vmatprep.subr.bf16.mxu0 0
    %231 = vmatpush1.bf16.msra.mxu0 %v208
    %232 = vmatprep.subr.bf16.mxu0 0
    %233 = vmatpush1.bf16.msra.mxu0 %v209
    %234 = vmatprep.subr.bf16.mxu0 0
    %235 = vmatpush1.bf16.msra.mxu0 0
    %236 = vmatprep.subr.bf16.mxu0 0
    %237 = vmatpush1.bf16.msra.mxu0 0
    %238 = vmatprep.subr.bf16.mxu0 0
    %239 = vmatpush1.bf16.msra.mxu0 0
    %240 = vmatprep.subr.bf16.mxu0 0
    %241 = vmatpush1.bf16.msra.mxu0 0
    %242 = vmatprep.subr.bf16.mxu0 0
    %243 = vmatpush1.bf16.msra.mxu0 0
    %244 = vmatprep.subr.bf16.mxu0 0
    %245 = vmatpush1.bf16.msra.mxu0 0
    %246 = vmatprep.subr.bf16.mxu0 0
    %247 = vmatpush1.bf16.msra.mxu0 0
    %248 = vmatprep.subr.bf16.mxu0 0
    %249 = vmatpush1.bf16.msra.mxu0 0
    %250 = vmatprep.mubr.bf16.mxu0 0
    %251 = vmatmul.mubr.bf16.gmra.mrb[0].mxu0 %v162
    %v252 = vpop.f32.mrb[0].mxu0
    %v253 = vadd.f32 0.0, %v252
    %v254 = vpop.f32.mrb[0].mxu0
    %v255 = vpop.f32.mrb[0].mxu0
    %v256 = vadd.f32 0.0, %v255
    %v257 = vpop.f32.mrb[0].mxu0
    %258 = vmatprep.mubr.bf16.mxu0 0
    %259 = vmatmul.mubr.bf16.gmra.mrb[0].mxu0 %v163
    %v260 = vpop.f32.mrb[0].mxu0
    %v261 = vadd.f32 0.0, %v260
    %v262 = vpop.f32.mrb[0].mxu0
    %v263 = vpop.f32.mrb[0].mxu0
    %v264 = vadd.f32 0.0, %v263
    %v265 = vpop.f32.mrb[0].mxu0
    %266 = vmatprep.mubr.bf16.mxu0 0
    %267 = vmatmul.mubr.bf16.gmra.mrb[0].mxu0 %v164
    %v268 = vpop.f32.mrb[0].mxu0
    %v269 = vadd.f32 0.0, %v268
    %v270 = vpop.f32.mrb[0].mxu0
    %v271 = vpop.f32.mrb[0].mxu0
    %v272 = vadd.f32 0.0, %v271
    %v273 = vpop.f32.mrb[0].mxu0
    %274 = vmatprep.mubr.bf16.mxu0 0
    %275 = vmatmul.mubr.bf16.gmra.mrb[0].mxu0 %v165
    %v276 = vpop.f32.mrb[0].mxu0
    %v277 = vadd.f32 0.0, %v276
    %v278 = vpop.f32.mrb[0].mxu0
    %v279 = vpop.f32.mrb[0].mxu0
    %v280 = vadd.f32 0.0, %v279
    %v281 = vpop.f32.mrb[0].mxu0
    %282 = vdwg.mxu0
    %s283 = scalar_lea.vmem [#allocation5], 64
    %v284 = vld [vmem:[%s283] sm:$0xf]
    %v285 = vld [vmem:[%s283 + $0x4] sm:$0xf]
    %v286 = vld [vmem:[%s283 + $0x8] sm:$0xf]
    %v287 = vld [vmem:[%s283 + $0xc] sm:$0xf]
    %v288 = vld [vmem:[%s283 + $0x10] sm:$0xf]
    %v289 = vld [vmem:[%s283 + $0x14] sm:$0xf]
    %v290 = vld [vmem:[%s283 + $0x18] sm:$0xf]
    %v291 = vld [vmem:[%s283 + $0x1c] sm:$0xf]
    %v292 = vld [vmem:[%s283 + $0x20] sm:$0xf]
    %v293 = vld [vmem:[%s283 + $0x24] sm:$0xf]
    %v294 = vld [vmem:[%s283 + $0x28] sm:$0xf]
    %v295 = vld [vmem:[%s283 + $0x2c] sm:$0xf]
    %v296 = vld [vmem:[%s283 + $0x30] sm:$0xf]
    %v297 = vld [vmem:[%s283 + $0x34] sm:$0xf]
    %v298 = vld [vmem:[%s283 + $0x38] sm:$0xf]
    %v299 = vld [vmem:[%s283 + $0x3c] sm:$0xf]
    %v316 = vunpack.c.l.b16 %v284
    %v317 = vunpack.c.l.b16 %v285
    %v318 = vunpack.c.l.b16 %v286
    %v319 = vunpack.c.l.b16 %v287
    %v320 = vunpack.c.l.b16 %v288
    %v321 = vunpack.c.l.b16 %v289
    %v322 = vunpack.c.l.b16 %v290
    %v323 = vunpack.c.l.b16 %v291
    %v324 = vunpack.c.l.b16 %v292
    %v325 = vunpack.c.l.b16 %v293
    %v326 = vunpack.c.l.b16 %v294
    %v327 = vunpack.c.l.b16 %v295
    %v328 = vunpack.c.l.b16 %v296
    %v329 = vunpack.c.l.b16 %v297
    %v330 = vunpack.c.l.b16 %v298
    %v331 = vunpack.c.l.b16 %v299
    %v332 = vpack.c.b16 %v317, %v316
    %v333 = vpack.c.b16 %v319, %v318
    %v334 = vpack.c.b16 %v321, %v320
    %v335 = vpack.c.b16 %v323, %v322
    %v336 = vpack.c.b16 %v325, %v324
    %v337 = vpack.c.b16 %v327, %v326
    %v338 = vpack.c.b16 %v329, %v328
    %v339 = vpack.c.b16 %v331, %v330
    %348 = vmatprep.subr.bf16.mxu0 0
    %349 = vmatpush1.bf16.msra.mxu0 %v332
    %350 = vmatprep.subr.bf16.mxu0 0
    %351 = vmatpush1.bf16.msra.mxu0 %v333
    %352 = vmatprep.subr.bf16.mxu0 0
    %353 = vmatpush1.bf16.msra.mxu0 %v334
    %354 = vmatprep.subr.bf16.mxu0 0
    %355 = vmatpush1.bf16.msra.mxu0 %v335
    %356 = vmatprep.subr.bf16.mxu0 0
    %357 = vmatpush1.bf16.msra.mxu0 %v336
    %358 = vmatprep.subr.bf16.mxu0 0
    %359 = vmatpush1.bf16.msra.mxu0 %v337
    %360 = vmatprep.subr.bf16.mxu0 0
    %361 = vmatpush1.bf16.msra.mxu0 %v338
    %362 = vmatprep.subr.bf16.mxu0 0
    %363 = vmatpush1.bf16.msra.mxu0 %v339
    %364 = vmatprep.subr.bf16.mxu0 0
    %365 = vmatpush1.bf16.msra.mxu0 0
    %366 = vmatprep.subr.bf16.mxu0 0
    %367 = vmatpush1.bf16.msra.mxu0 0
    %368 = vmatprep.subr.bf16.mxu0 0
    %369 = vmatpush1.bf16.msra.mxu0 0
    %370 = vmatprep.subr.bf16.mxu0 0
    %371 = vmatpush1.bf16.msra.mxu0 0
    %372 = vmatprep.subr.bf16.mxu0 0
    %373 = vmatpush1.bf16.msra.mxu0 0
    %374 = vmatprep.subr.bf16.mxu0 0
    %375 = vmatpush1.bf16.msra.mxu0 0
    %376 = vmatprep.subr.bf16.mxu0 0
    %377 = vmatpush1.bf16.msra.mxu0 0
    %378 = vmatprep.subr.bf16.mxu0 0
    %379 = vmatpush1.bf16.msra.mxu0 0
    %380 = vmatprep.mubr.bf16.mxu0 0
    %381 = vmatmul.mubr.bf16.gmra.mrb[0].mxu0 %v162
    %v382 = vpop.f32.mrb[0].mxu0
    %v383 = vadd.f32 0.0, %v382
    %v384 = vpop.f32.mrb[0].mxu0
    %v385 = vpop.f32.mrb[0].mxu0
    %v386 = vadd.f32 0.0, %v385
    %v387 = vpop.f32.mrb[0].mxu0
    %388 = vmatprep.mubr.bf16.mxu0 0
    %389 = vmatmul.mubr.bf16.gmra.mrb[0].mxu0 %v163
    %v390 = vpop.f32.mrb[0].mxu0
    %v391 = vadd.f32 0.0, %v390
    %v392 = vpop.f32.mrb[0].mxu0
    %v393 = vpop.f32.mrb[0].mxu0
    %v394 = vadd.f32 0.0, %v393
    %v395 = vpop.f32.mrb[0].mxu0
    %396 = vmatprep.mubr.bf16.mxu0 0
    %397 = vmatmul.mubr.bf16.gmra.mrb[0].mxu0 %v164
    %v398 = vpop.f32.mrb[0].mxu0
    %v399 = vadd.f32 0.0, %v398
    %v400 = vpop.f32.mrb[0].mxu0
    %v401 = vpop.f32.mrb[0].mxu0
    %v402 = vadd.f32 0.0, %v401
    %v403 = vpop.f32.mrb[0].mxu0
    %404 = vmatprep.mubr.bf16.mxu0 0
    %405 = vmatmul.mubr.bf16.gmra.mrb[0].mxu0 %v165
    %v406 = vpop.f32.mrb[0].mxu0
    %v407 = vadd.f32 0.0, %v406
    %v408 = vpop.f32.mrb[0].mxu0
    %v409 = vpop.f32.mrb[0].mxu0
    %v410 = vadd.f32 0.0, %v409
    %v411 = vpop.f32.mrb[0].mxu0
    %412 = vdwg.mxu0
    %v421 = vrot.slane %v383, 1
    %v422 = vrot.slane %v386, 1
    %v423 = vrot.slane %v391, 1
    %v424 = vrot.slane %v394, 1
    %v425 = vrot.slane %v399, 1
    %v426 = vrot.slane %v402, 1
    %v427 = vrot.slane %v407, 1
    %v428 = vrot.slane %v410, 1
    %v437 = vadd.f32 %v253, %v421
    %v438 = vadd.f32 %v256, %v422
    %v439 = vadd.f32 %v261, %v423
    %v440 = vadd.f32 %v264, %v424
    %v441 = vadd.f32 %v269, %v425
    %v442 = vadd.f32 %v272, %v426
    %v443 = vadd.f32 %v277, %v427
    %v444 = vadd.f32 %v280, %v428
    %vm445 = vcmask 1046528
    %v446 = vsel %vm445, %v437, -inf
    %v447 = vrot.slane %v446, 4
    %v448 = vmax.f32 %v446, %v447
    %v449 = vrot.slane %v448, 2
    %v450 = vmax.f32 %v448, %v449
    %v451 = vrot.slane %v450, 1
    %v452 = vmax.f32 %v450, %v451
    %v453 = vsel %vm445, %v438, -inf
    %v454 = vrot.slane %v453, 4
    %v455 = vmax.f32 %v453, %v454
    %v456 = vrot.slane %v455, 2
    %v457 = vmax.f32 %v455, %v456
    %v458 = vrot.slane %v457, 1
    %v459 = vmax.f32 %v457, %v458
    %v460 = vsel %vm445, %v439, -inf
    %v461 = vrot.slane %v460, 4
    %v462 = vmax.f32 %v460, %v461
    %v463 = vrot.slane %v462, 2
    %v464 = vmax.f32 %v462, %v463
    %v465 = vrot.slane %v464, 1
    %v466 = vmax.f32 %v464, %v465
    %v467 = vsel %vm445, %v440, -inf
    %v468 = vrot.slane %v467, 4
    %v469 = vmax.f32 %v467, %v468
    %v470 = vrot.slane %v469, 2
    %v471 = vmax.f32 %v469, %v470
    %v472 = vrot.slane %v471, 1
    %v473 = vmax.f32 %v471, %v472
    %v474 = vsel %vm445, %v441, -inf
    %v475 = vrot.slane %v474, 4
    %v476 = vmax.f32 %v474, %v475
    %v477 = vrot.slane %v476, 2
    %v478 = vmax.f32 %v476, %v477
    %v479 = vrot.slane %v478, 1
    %v480 = vmax.f32 %v478, %v479
    %v481 = vsel %vm445, %v442, -inf
    %v482 = vrot.slane %v481, 4
    %v483 = vmax.f32 %v481, %v482
    %v484 = vrot.slane %v483, 2
    %v485 = vmax.f32 %v483, %v484
    %v486 = vrot.slane %v485, 1
    %v487 = vmax.f32 %v485, %v486
    %v488 = vsel %vm445, %v443, -inf
    %v489 = vrot.slane %v488, 4
    %v490 = vmax.f32 %v488, %v489
    %v491 = vrot.slane %v490, 2
    %v492 = vmax.f32 %v490, %v491
    %v493 = vrot.slane %v492, 1
    %v494 = vmax.f32 %v492, %v493
    %v495 = vsel %vm445, %v444, -inf
    %v496 = vrot.slane %v495, 4
    %v497 = vmax.f32 %v495, %v496
    %v498 = vrot.slane %v497, 2
    %v499 = vmax.f32 %v497, %v498
    %v500 = vrot.slane %v499, 1
    %v501 = vmax.f32 %v499, %v500
    %v502 = vld [vmem:[%s2] sm:$0x1]
    %v504 = vlaneseq
    %v505 = vshrl.u32 %v504, 7
    %v506 = vsub.s32 0, %v505
    %v507 = vrot.slane %v502, %v506
    %v509 = vadd.f32 %v452, %v507
    %v510 = vadd.f32 %v459, %v507
    %v511 = vadd.f32 %v466, %v507
    %v512 = vadd.f32 %v473, %v507
    %v513 = vadd.f32 %v480, %v507
    %v514 = vadd.f32 %v487, %v507
    %v515 = vadd.f32 %v494, %v507
    %v516 = vadd.f32 %v501, %v507
    %v517 = vmax.f32 %v509, 0.0
    %v518 = vmax.f32 %v510, 0.0
    %v519 = vmax.f32 %v511, 0.0
    %v520 = vmax.f32 %v512, 0.0
    %v521 = vmax.f32 %v513, 0.0
    %v522 = vmax.f32 %v514, 0.0
    %v523 = vmax.f32 %v515, 0.0
    %v524 = vmax.f32 %v516, 0.0
    %v525 = vpack.c.bf16 %v517, %v517
    %v526 = vpack.c.bf16 %v518, %v518
    %v527 = vpack.c.bf16 %v519, %v519
    %v528 = vpack.c.bf16 %v520, %v520
    %v529 = vpack.c.bf16 %v521, %v521
    %v530 = vpack.c.bf16 %v522, %v522
    %v531 = vpack.c.bf16 %v523, %v523
    %v532 = vpack.c.bf16 %v524, %v524
    %v533 = vld [vmem:[#allocation7] sm:$0xf]
    %v534 = vld [vmem:[#allocation7 + $0x4] sm:$0xf]
    %v535 = vld [vmem:[#allocation7 + $0x8] sm:$0xf]
    %v536 = vld [vmem:[#allocation7 + $0xc] sm:$0xf]
    %v537 = vld [vmem:[#allocation7 + $0x10] sm:$0xf]
    %v538 = vld [vmem:[#allocation7 + $0x14] sm:$0xf]
    %v539 = vld [vmem:[#allocation7 + $0x18] sm:$0xf]
    %v540 = vld [vmem:[#allocation7 + $0x1c] sm:$0xf]
    %v541 = vld [vmem:[#allocation7 + $0x20] sm:$0xf]
    %v542 = vld [vmem:[#allocation7 + $0x24] sm:$0xf]
    %v543 = vld [vmem:[#allocation7 + $0x28] sm:$0xf]
    %v544 = vld [vmem:[#allocation7 + $0x2c] sm:$0xf]
    %v545 = vld [vmem:[#allocation7 + $0x30] sm:$0xf]
    %v546 = vld [vmem:[#allocation7 + $0x34] sm:$0xf]
    %v547 = vld [vmem:[#allocation7 + $0x38] sm:$0xf]
    %v548 = vld [vmem:[#allocation7 + $0x3c] sm:$0xf]
    %v549 = vld [vmem:[%s4] sm:$0x1]
    %v551 = vlaneseq
    %v552 = vshrl.u32 %v551, 7
    %v553 = vsub.s32 0, %v552
    %v554 = vrot.slane %v549, %v553
    %v564 = vunpack.c.l.b16 %v525
    %v565 = vunpack.c.l.b16 %v526
    %v566 = vunpack.c.l.b16 %v527
    %v567 = vunpack.c.l.b16 %v528
    %v568 = vunpack.c.l.b16 %v529
    %v569 = vunpack.c.l.b16 %v530
    %v570 = vunpack.c.l.b16 %v531
    %v571 = vunpack.c.l.b16 %v532
    %v572 = vrot.slane %v565, 7
    %vm573 = vcmask 1041409
    %v574 = vsel %vm573, %v572, %v564
    %v575 = vrot.slane %v566, 6
    %vm576 = vcmask 1042434
    %v577 = vsel %vm576, %v575, %v574
    %v578 = vrot.slane %v567, 5
    %vm579 = vcmask 1043459
    %v580 = vsel %vm579, %v578, %v577
    %v581 = vrot.slane %v568, 4
    %vm582 = vcmask 1044484
    %v583 = vsel %vm582, %v581, %v580
    %v584 = vrot.slane %v569, 3
    %vm585 = vcmask 1045509
    %v586 = vsel %vm585, %v584, %v583
    %v587 = vrot.slane %v570, 2
    %vm588 = vcmask 1046534
    %v589 = vsel %vm588, %v587, %v586
    %v590 = vrot.slane %v571, 1
    %vm591 = vcmask 1047559
    %v592 = vsel %vm591, %v590, %v589
    %v593 = vpack.c.b16 %v592, %v592
    %v611 = vunpack.c.l.b16 %v533
    %v612 = vunpack.c.l.b16 %v534
    %v613 = vunpack.c.l.b16 %v535
    %v614 = vunpack.c.l.b16 %v536
    %v615 = vunpack.c.l.b16 %v537
    %v616 = vunpack.c.l.b16 %v538
    %v617 = vunpack.c.l.b16 %v539
    %v618 = vunpack.c.l.b16 %v540
    %v619 = vunpack.c.l.b16 %v541
    %v620 = vunpack.c.l.b16 %v542
    %v621 = vunpack.c.l.b16 %v543
    %v622 = vunpack.c.l.b16 %v544
    %v623 = vunpack.c.l.b16 %v545
    %v624 = vunpack.c.l.b16 %v546
    %v625 = vunpack.c.l.b16 %v547
    %v626 = vunpack.c.l.b16 %v548
    %v627 = vpack.c.b16 %v612, %v611
    %v628 = vpack.c.b16 %v614, %v613
    %v629 = vpack.c.b16 %v616, %v615
    %v630 = vpack.c.b16 %v618, %v617
    %v631 = vpack.c.b16 %v620, %v619
    %v632 = vpack.c.b16 %v622, %v621
    %v633 = vpack.c.b16 %v624, %v623
    %v634 = vpack.c.b16 %v626, %v625
    %643 = vmatprep.subr.bf16.mxu0 0
    %644 = vmatpush1.bf16.msra.mxu0 %v627
    %645 = vmatprep.subr.bf16.mxu0 0
    %646 = vmatpush1.bf16.msra.mxu0 %v628
    %647 = vmatprep.subr.bf16.mxu0 0
    %648 = vmatpush1.bf16.msra.mxu0 %v629
    %649 = vmatprep.subr.bf16.mxu0 0
    %650 = vmatpush1.bf16.msra.mxu0 %v630
    %651 = vmatprep.subr.bf16.mxu0 0
    %652 = vmatpush1.bf16.msra.mxu0 %v631
    %653 = vmatprep.subr.bf16.mxu0 0
    %654 = vmatpush1.bf16.msra.mxu0 %v632
    %655 = vmatprep.subr.bf16.mxu0 0
    %656 = vmatpush1.bf16.msra.mxu0 %v633
    %657 = vmatprep.subr.bf16.mxu0 0
    %658 = vmatpush1.bf16.msra.mxu0 %v634
    %659 = vmatprep.subr.bf16.mxu0 0
    %660 = vmatpush1.bf16.msra.mxu0 0
    %661 = vmatprep.subr.bf16.mxu0 0
    %662 = vmatpush1.bf16.msra.mxu0 0
    %663 = vmatprep.subr.bf16.mxu0 0
    %664 = vmatpush1.bf16.msra.mxu0 0
    %665 = vmatprep.subr.bf16.mxu0 0
    %666 = vmatpush1.bf16.msra.mxu0 0
    %667 = vmatprep.subr.bf16.mxu0 0
    %668 = vmatpush1.bf16.msra.mxu0 0
    %669 = vmatprep.subr.bf16.mxu0 0
    %670 = vmatpush1.bf16.msra.mxu0 0
    %671 = vmatprep.subr.bf16.mxu0 0
    %672 = vmatpush1.bf16.msra.mxu0 0
    %673 = vmatprep.subr.bf16.mxu0 0
    %674 = vmatpush1.bf16.msra.mxu0 0
    %675 = vmatprep.mubr.bf16.mxu0 0
    %676 = vmatmul.mubr.bf16.gmra.mrb[0].mxu0 %v593
    %v677 = vpop.f32.mrb[0].mxu0
    %v678 = vadd.f32 %v554, %v677
    %v679 = vpop.f32.mrb[0].mxu0
    %v680 = vpop.f32.mrb[0].mxu0
    %v681 = vpop.f32.mrb[0].mxu0
    %682 = vdwg.mxu0
    %v683 = vsub.f32 0.0, %v678
    %v684 = vmul.f32 %v683, 1.442695
    %v685 = vpow.pop %v684
    %v686 = vadd.f32 %v685, 1.0
    %v687 = vrcp.pop %v686
    %v688 = vpack.c.bf16 %v687, %v687
    %v689 = vld [vmem:[#allocation8] sm:$0xf]
    %v690 = vld [vmem:[#allocation8 + $0x4] sm:$0xf]
    %v691 = vld [vmem:[#allocation8 + $0x8] sm:$0xf]
    %v692 = vld [vmem:[#allocation8 + $0xc] sm:$0xf]
    %v693 = vld [vmem:[#allocation8 + $0x10] sm:$0xf]
    %v694 = vld [vmem:[#allocation8 + $0x14] sm:$0xf]
    %v695 = vld [vmem:[#allocation8 + $0x18] sm:$0xf]
    %v696 = vld [vmem:[#allocation8 + $0x1c] sm:$0xf]
    %v697 = vld [vmem:[#allocation8 + $0x20] sm:$0xf]
    %v698 = vld [vmem:[#allocation8 + $0x24] sm:$0xf]
    %v699 = vld [vmem:[#allocation8 + $0x28] sm:$0xf]
    %v700 = vld [vmem:[#allocation8 + $0x2c] sm:$0xf]
    %v701 = vld [vmem:[#allocation8 + $0x30] sm:$0xf]
    %v702 = vld [vmem:[#allocation8 + $0x34] sm:$0xf]
    %v703 = vld [vmem:[#allocation8 + $0x38] sm:$0xf]
    %v704 = vld [vmem:[#allocation8 + $0x3c] sm:$0xf]
    %v705 = vld [vmem:[%s6] sm:$0x1]
    %v707 = vlaneseq
    %v708 = vshrl.u32 %v707, 7
    %v709 = vsub.s32 0, %v708
    %v710 = vrot.slane %v705, %v709
    %v728 = vunpack.c.l.b16 %v689
    %v729 = vunpack.c.l.b16 %v690
    %v730 = vunpack.c.l.b16 %v691
    %v731 = vunpack.c.l.b16 %v692
    %v732 = vunpack.c.l.b16 %v693
    %v733 = vunpack.c.l.b16 %v694
    %v734 = vunpack.c.l.b16 %v695
    %v735 = vunpack.c.l.b16 %v696
    %v736 = vunpack.c.l.b16 %v697
    %v737 = vunpack.c.l.b16 %v698
    %v738 = vunpack.c.l.b16 %v699
    %v739 = vunpack.c.l.b16 %v700
    %v740 = vunpack.c.l.b16 %v701
    %v741 = vunpack.c.l.b16 %v702
    %v742 = vunpack.c.l.b16 %v703
    %v743 = vunpack.c.l.b16 %v704
    %v744 = vpack.c.b16 %v729, %v728
    %v745 = vpack.c.b16 %v731, %v730
    %v746 = vpack.c.b16 %v733, %v732
    %v747 = vpack.c.b16 %v735, %v734
    %v748 = vpack.c.b16 %v737, %v736
    %v749 = vpack.c.b16 %v739, %v738
    %v750 = vpack.c.b16 %v741, %v740
    %v751 = vpack.c.b16 %v743, %v742
    %760 = vmatprep.subr.bf16.mxu0 0
    %761 = vmatpush1.bf16.msra.mxu0 %v744
    %762 = vmatprep.subr.bf16.mxu0 0
    %763 = vmatpush1.bf16.msra.mxu0 %v745
    %764 = vmatprep.subr.bf16.mxu0 0
    %765 = vmatpush1.bf16.msra.mxu0 %v746
    %766 = vmatprep.subr.bf16.mxu0 0
    %767 = vmatpush1.bf16.msra.mxu0 %v747
    %768 = vmatprep.subr.bf16.mxu0 0
    %769 = vmatpush1.bf16.msra.mxu0 %v748
    %770 = vmatprep.subr.bf16.mxu0 0
    %771 = vmatpush1.bf16.msra.mxu0 %v749
    %772 = vmatprep.subr.bf16.mxu0 0
    %773 = vmatpush1.bf16.msra.mxu0 %v750
    %774 = vmatprep.subr.bf16.mxu0 0
    %775 = vmatpush1.bf16.msra.mxu0 %v751
    %776 = vmatprep.subr.bf16.mxu0 0
    %777 = vmatpush1.bf16.msra.mxu0 0
    %778 = vmatprep.subr.bf16.mxu0 0
    %779 = vmatpush1.bf16.msra.mxu0 0
    %780 = vmatprep.subr.bf16.mxu0 0
    %781 = vmatpush1.bf16.msra.mxu0 0
    %782 = vmatprep.subr.bf16.mxu0 0
    %783 = vmatpush1.bf16.msra.mxu0 0
    %784 = vmatprep.subr.bf16.mxu0 0
    %785 = vmatpush1.bf16.msra.mxu0 0
    %786 = vmatprep.subr.bf16.mxu0 0
    %787 = vmatpush1.bf16.msra.mxu0 0
    %788 = vmatprep.subr.bf16.mxu0 0
    %789 = vmatpush1.bf16.msra.mxu0 0
    %790 = vmatprep.subr.bf16.mxu0 0
    %791 = vmatpush1.bf16.msra.mxu0 0
    %792 = vmatprep.mubr.bf16.mxu0 0
    %793 = vmatmul.mubr.bf16.gmra.mrb[0].mxu0 %v688
    %v794 = vpop.f32.mrb[0].mxu0
    %v795 = vadd.f32 %v710, %v794
    %v796 = vpop.f32.mrb[0].mxu0
    %v797 = vpop.f32.mrb[0].mxu0
    %v798 = vpop.f32.mrb[0].mxu0
    %799 = vdwg.mxu0
    %v800 = vsub.f32 0.0, %v795
    %v801 = vmul.f32 %v800, 1.442695
    %v802 = vpow.pop %v801
    %v803 = vadd.f32 %v802, 1.0
    %v804 = vrcp.pop %v803
    %v805 = vpack.c.bf16 %v804, %v804
    %v806 = vld [vmem:[#allocation10] sm:$0xf]
    %v807 = vld [vmem:[#allocation10 + $0x4] sm:$0xf]
    %v808 = vld [vmem:[#allocation10 + $0x8] sm:$0xf]
    %v809 = vld [vmem:[#allocation10 + $0xc] sm:$0xf]
    %v810 = vld [vmem:[#allocation10 + $0x10] sm:$0xf]
    %v811 = vld [vmem:[#allocation10 + $0x14] sm:$0xf]
    %v812 = vld [vmem:[#allocation10 + $0x18] sm:$0xf]
    %v813 = vld [vmem:[#allocation10 + $0x1c] sm:$0xf]
    %v814 = vld [vmem:[#allocation10 + $0x20] sm:$0xf]
    %v815 = vld [vmem:[#allocation10 + $0x24] sm:$0xf]
    %v816 = vld [vmem:[#allocation10 + $0x28] sm:$0xf]
    %v817 = vld [vmem:[#allocation10 + $0x2c] sm:$0xf]
    %v818 = vld [vmem:[#allocation10 + $0x30] sm:$0xf]
    %v819 = vld [vmem:[#allocation10 + $0x34] sm:$0xf]
    %v820 = vld [vmem:[#allocation10 + $0x38] sm:$0xf]
    %v821 = vld [vmem:[#allocation10 + $0x3c] sm:$0xf]
    %v822 = vld [vmem:[%s8] sm:$0x1]
    %v824 = vlaneseq
    %v825 = vshrl.u32 %v824, 7
    %v826 = vsub.s32 0, %v825
    %v827 = vrot.slane %v822, %v826
    %v845 = vunpack.c.l.b16 %v806
    %v846 = vunpack.c.l.b16 %v807
    %v847 = vunpack.c.l.b16 %v808
    %v848 = vunpack.c.l.b16 %v809
    %v849 = vunpack.c.l.b16 %v810
    %v850 = vunpack.c.l.b16 %v811
    %v851 = vunpack.c.l.b16 %v812
    %v852 = vunpack.c.l.b16 %v813
    %v853 = vunpack.c.l.b16 %v814
    %v854 = vunpack.c.l.b16 %v815
    %v855 = vunpack.c.l.b16 %v816
    %v856 = vunpack.c.l.b16 %v817
    %v857 = vunpack.c.l.b16 %v818
    %v858 = vunpack.c.l.b16 %v819
    %v859 = vunpack.c.l.b16 %v820
    %v860 = vunpack.c.l.b16 %v821
    %v861 = vpack.c.b16 %v846, %v845
    %v862 = vpack.c.b16 %v848, %v847
    %v863 = vpack.c.b16 %v850, %v849
    %v864 = vpack.c.b16 %v852, %v851
    %v865 = vpack.c.b16 %v854, %v853
    %v866 = vpack.c.b16 %v856, %v855
    %v867 = vpack.c.b16 %v858, %v857
    %v868 = vpack.c.b16 %v860, %v859
    %877 = vmatprep.subr.bf16.mxu0 0
    %878 = vmatpush1.bf16.msra.mxu0 %v861
    %879 = vmatprep.subr.bf16.mxu0 0
    %880 = vmatpush1.bf16.msra.mxu0 %v862
    %881 = vmatprep.subr.bf16.mxu0 0
    %882 = vmatpush1.bf16.msra.mxu0 %v863
    %883 = vmatprep.subr.bf16.mxu0 0
    %884 = vmatpush1.bf16.msra.mxu0 %v864
    %885 = vmatprep.subr.bf16.mxu0 0
    %886 = vmatpush1.bf16.msra.mxu0 %v865
    %887 = vmatprep.subr.bf16.mxu0 0
    %888 = vmatpush1.bf16.msra.mxu0 %v866
    %889 = vmatprep.subr.bf16.mxu0 0
    %890 = vmatpush1.bf16.msra.mxu0 %v867
    %891 = vmatprep.subr.bf16.mxu0 0
    %892 = vmatpush1.bf16.msra.mxu0 %v868
    %893 = vmatprep.subr.bf16.mxu0 0
    %894 = vmatpush1.bf16.msra.mxu0 0
    %895 = vmatprep.subr.bf16.mxu0 0
    %896 = vmatpush1.bf16.msra.mxu0 0
    %897 = vmatprep.subr.bf16.mxu0 0
    %898 = vmatpush1.bf16.msra.mxu0 0
    %899 = vmatprep.subr.bf16.mxu0 0
    %900 = vmatpush1.bf16.msra.mxu0 0
    %901 = vmatprep.subr.bf16.mxu0 0
    %902 = vmatpush1.bf16.msra.mxu0 0
    %903 = vmatprep.subr.bf16.mxu0 0
    %904 = vmatpush1.bf16.msra.mxu0 0
    %905 = vmatprep.subr.bf16.mxu0 0
    %906 = vmatpush1.bf16.msra.mxu0 0
    %907 = vmatprep.subr.bf16.mxu0 0
    %908 = vmatpush1.bf16.msra.mxu0 0
    %909 = vmatprep.mubr.bf16.mxu0 0
    %910 = vmatmul.mubr.bf16.gmra.mrb[0].mxu0 %v805
    %v911 = vpop.f32.mrb[0].mxu0
    %v912 = vadd.f32 %v827, %v911
    %v913 = vpop.f32.mrb[0].mxu0
    %v914 = vpop.f32.mrb[0].mxu0
    %v915 = vpop.f32.mrb[0].mxu0
    %916 = vdwg.mxu0
    %v917 = vsub.f32 0.0, %v912
    %v918 = vmul.f32 %v917, 1.442695
    %v919 = vpow.pop %v918
    %v920 = vadd.f32 %v919, 1.0
    %v921 = vrcp.pop %v920
    %v922 = vpack.c.bf16 %v921, %v921
    %v923 = vld [vmem:[#allocation11] sm:$0xf]
    %v924 = vld [vmem:[#allocation11 + $0x4] sm:$0xf]
    %v925 = vld [vmem:[#allocation11 + $0x8] sm:$0xf]
    %v926 = vld [vmem:[#allocation11 + $0xc] sm:$0xf]
    %v927 = vld [vmem:[#allocation11 + $0x10] sm:$0xf]
    %v928 = vld [vmem:[#allocation11 + $0x14] sm:$0xf]
    %v929 = vld [vmem:[#allocation11 + $0x18] sm:$0xf]
    %v930 = vld [vmem:[#allocation11 + $0x1c] sm:$0xf]
    %v931 = vld [vmem:[#allocation11 + $0x20] sm:$0xf]
    %v932 = vld [vmem:[#allocation11 + $0x24] sm:$0xf]
    %v933 = vld [vmem:[#allocation11 + $0x28] sm:$0xf]
    %v934 = vld [vmem:[#allocation11 + $0x2c] sm:$0xf]
    %v935 = vld [vmem:[#allocation11 + $0x30] sm:$0xf]
    %v936 = vld [vmem:[#allocation11 + $0x34] sm:$0xf]
    %v937 = vld [vmem:[#allocation11 + $0x38] sm:$0xf]
    %v938 = vld [vmem:[#allocation11 + $0x3c] sm:$0xf]
    %v939 = vld [vmem:[%s10] sm:$0x1]
    %v941 = vlaneseq
    %v942 = vshrl.u32 %v941, 7
    %v943 = vsub.s32 0, %v942
    %v944 = vrot.slane %v939, %v943
    %v962 = vunpack.c.l.b16 %v923
    %v963 = vunpack.c.l.b16 %v924
    %v964 = vunpack.c.l.b16 %v925
    %v965 = vunpack.c.l.b16 %v926
    %v966 = vunpack.c.l.b16 %v927
    %v967 = vunpack.c.l.b16 %v928
    %v968 = vunpack.c.l.b16 %v929
    %v969 = vunpack.c.l.b16 %v930
    %v970 = vunpack.c.l.b16 %v931
    %v971 = vunpack.c.l.b16 %v932
    %v972 = vunpack.c.l.b16 %v933
    %v973 = vunpack.c.l.b16 %v934
    %v974 = vunpack.c.l.b16 %v935
    %v975 = vunpack.c.l.b16 %v936
    %v976 = vunpack.c.l.b16 %v937
    %v977 = vunpack.c.l.b16 %v938
    %v978 = vpack.c.b16 %v963, %v962
    %v979 = vpack.c.b16 %v965, %v964
    %v980 = vpack.c.b16 %v967, %v966
    %v981 = vpack.c.b16 %v969, %v968
    %v982 = vpack.c.b16 %v971, %v970
    %v983 = vpack.c.b16 %v973, %v972
    %v984 = vpack.c.b16 %v975, %v974
    %v985 = vpack.c.b16 %v977, %v976
    %994 = vmatprep.subr.bf16.mxu0 0
    %995 = vmatpush1.bf16.msra.mxu0 %v978
    %996 = vmatprep.subr.bf16.mxu0 0
    %997 = vmatpush1.bf16.msra.mxu0 %v979
    %998 = vmatprep.subr.bf16.mxu0 0
    %999 = vmatpush1.bf16.msra.mxu0 %v980
    %1000 = vmatprep.subr.bf16.mxu0 0
    %1001 = vmatpush1.bf16.msra.mxu0 %v981
    %1002 = vmatprep.subr.bf16.mxu0 0
    %1003 = vmatpush1.bf16.msra.mxu0 %v982
    %1004 = vmatprep.subr.bf16.mxu0 0
    %1005 = vmatpush1.bf16.msra.mxu0 %v983
    %1006 = vmatprep.subr.bf16.mxu0 0
    %1007 = vmatpush1.bf16.msra.mxu0 %v984
    %1008 = vmatprep.subr.bf16.mxu0 0
    %1009 = vmatpush1.bf16.msra.mxu0 %v985
    %1010 = vmatprep.subr.bf16.mxu0 0
    %1011 = vmatpush1.bf16.msra.mxu0 0
    %1012 = vmatprep.subr.bf16.mxu0 0
    %1013 = vmatpush1.bf16.msra.mxu0 0
    %1014 = vmatprep.subr.bf16.mxu0 0
    %1015 = vmatpush1.bf16.msra.mxu0 0
    %1016 = vmatprep.subr.bf16.mxu0 0
    %1017 = vmatpush1.bf16.msra.mxu0 0
    %1018 = vmatprep.subr.bf16.mxu0 0
    %1019 = vmatpush1.bf16.msra.mxu0 0
    %1020 = vmatprep.subr.bf16.mxu0 0
    %1021 = vmatpush1.bf16.msra.mxu0 0
    %1022 = vmatprep.subr.bf16.mxu0 0
    %1023 = vmatpush1.bf16.msra.mxu0 0
    %1024 = vmatprep.subr.bf16.mxu0 0
    %1025 = vmatpush1.bf16.msra.mxu0 0
    %1026 = vmatprep.mubr.bf16.mxu0 0
    %1027 = vmatmul.mubr.bf16.gmra.mrb[0].mxu0 %v922
    %v1028 = vpop.f32.mrb[0].mxu0
    %v1029 = vadd.f32 %v944, %v1028
    %v1030 = vpop.f32.mrb[0].mxu0
    %v1031 = vpop.f32.mrb[0].mxu0
    %v1032 = vpop.f32.mrb[0].mxu0
    %1033 = vdwg.mxu0
    %1034 = vmax.xlane.f32.xlu0 %v1029
    %v1035 = vpop.xlane.xlu0 %1034
    %v1036 = vsub.f32 %v1029, %v1035
    %v1037 = vmul.f32 %v1036, 1.442695
    %v1038 = vpow.pop %v1037
    %1039 = vadd.xlane.f32.xlu0 %v1038
    %v1040 = vpop.xlane.xlu0 %1039
    %v1041 = vrcp.pop %v1040
    %v1042 = vmul.f32 %v1038, %v1041
    %1043 = vst [vmem:[#allocation13] sm:$0xff] %v1042
    // Predicated region
    $region70: #{tpu_custom_call.1} parent=1 // pred_check
      _
    $region71: #{tpu_custom_call.1} parent=1 // pred_check_branch
      %1045 = sbr.rel (0) target = $region73
    $region72: #{tpu_custom_call.1} parent=1 // pred_region
      %s1047 = ssub.s32 128, 128
      %1048 = vsyncadd [#allocation4], %s1047
      %s1050 = sshll.u32 [#allocation13], 4
      %s1051 = int_to_ptr.vmem [resolvable:$true] %s1050
      %1053 = dma.vmem_to_hbm [thread:$0]  %s1051, 128, %s11, [#allocation4]
    $region73: #{tpu_custom_call.1} parent=1 // pred_fallthru
      _
    // Predicated region
    $region74: #{tpu_custom_call.1} parent=1 // pred_check
      _
    $region75: #{tpu_custom_call.1} parent=1 // pred_check_branch
      %1055 = sbr.rel (0) target = $region77
    $region76: #{tpu_custom_call.1} parent=1 // pred_region
      %1056 = dma.done [#allocation4], 128
    $region77: #{tpu_custom_call.1} parent=1 // pred_fallthru
      _
    %1057 = vsyncpa [#allocation3], 1
    %1058 = vsyncpa [#allocation6], 1
    %1059 = vsyncpa [#allocation9], 1
    %1060 = vsyncpa [#allocation12], 1
    %1061 = vsyncpa [#allocation4], 1

</llo_original>
